<compile_context>
chip_gen: v7x
topology: tpu7x:2x2x1
jax: 0.10.0
libtpu: 0.0.40
codegen_flags: <defaults>
</compile_context>

<pallas_src>
import jax
import jax.numpy as jnp
from jax.experimental import pallas as pl
from jax.experimental.pallas import tpu as pltpu

_LANE = 128


def _round_up(x: int, m: int) -> int:
    return ((x + m - 1) // m) * m


def _make_dice_kernel(loss_weight: float):
    lw = float(loss_weight)

    def dice_kernel(x_ref, t_ref, m_ref, out_ref, a_sc, b_sc, c_sc):
        k = pl.program_id(0)

        @pl.when(k == 0)
        def _():
            a_sc[...] = jnp.zeros_like(a_sc)
            b_sc[...] = jnp.zeros_like(b_sc)
            c_sc[...] = jnp.zeros_like(c_sc)

        # Cast narrow inputs to f32 on-chip (free: VPU slot has slack).
        x = jax.nn.sigmoid(x_ref[...].astype(jnp.float32))  # (B, rows_tile, 128)
        t = t_ref[...].astype(jnp.float32)
        m = m_ref[...].astype(jnp.float32)

        xm = x * m
        tm = t * m

        # Only collapse the row axis per step; keep 128 lanes of partial sums
        # so the steady-state loop stays on VPU + DMA slots.
        a_sc[...] += jnp.sum(xm * tm, axis=1)   # (B, 128)
        b_sc[...] += jnp.sum(xm * xm, axis=1)
        c_sc[...] += jnp.sum(tm * tm, axis=1)

        @pl.when(k == pl.num_programs(0) - 1)
        def _():
            # Single cross-lane (XLU) reduction per call.
            a = jnp.sum(a_sc[...], axis=1, keepdims=True)           # (B, 1)
            b = jnp.sum(b_sc[...], axis=1, keepdims=True) + 0.001
            c = jnp.sum(c_sc[...], axis=1, keepdims=True) + 0.001
            d = 2.0 * a / (b + c)
            out_ref[...] = (lw * (1.0 - d)).astype(out_ref.dtype)

    return dice_kernel


def _choose_tiling(n: int, batch: int,
                   target_block_bytes: int = 2 << 20,
                   itemsize: int = 4):
    """Returns (rows_pad, rows_tile): per-sample row count after zero padding
    and the row tile size (multiple of 8), budgeted so a single f32 input
    block is <= ~target_block_bytes."""
    rows = -(-n // _LANE)  # ceil div
    max_rows = max(8, ((target_block_bytes // (batch * _LANE * itemsize)) // 8) * 8)
    if rows <= max_rows:
        rows_tile = _round_up(rows, 8)
        return rows_tile, rows_tile
    # Pad rows up to a small quantum, then pick the largest divisor tile that
    # fits the VMEM budget (avoids large zero-padding overhead).
    quantum = max(8, min(256, max_rows))
    rows_pad = _round_up(rows, quantum)
    q = rows_pad // quantum
    best = 1
    for d in range(min(q, max_rows // quantum), 0, -1):
        if q % d == 0:
            best = d
            break
    return rows_pad, best * quantum


def dice_loss(inp, target, mask, loss_weight: float = 1.0, reduce: bool = True,
              *, rows_tile: int | None = None):
    """Pallas implementation of DiceLoss.forward.

    inp/target/mask: arrays of shape (B, ...) (e.g. NCHW), any float/int dtype.
    Returns a scalar (reduce=True) or a (B,) vector of per-sample losses.
    """
    batch = inp.shape[0]
    x = inp.reshape(batch, -1)
    t = target.reshape(batch, -1)
    m = mask.reshape(batch, -1)
    n = x.shape[1]

    if rows_tile is None:
        rows_pad, rows_tile = _choose_tiling(n, batch)
    else:
        rows_tile = _round_up(int(rows_tile), 8)
        rows_pad = _round_up(-(-n // _LANE), rows_tile)

    n_pad = rows_pad * _LANE

    def prep(a):
        # Keep HBM traffic narrow; cast to f32 only inside the kernel.
        if a.dtype == jnp.bool_:
            a = a.astype(jnp.int8)
        if n_pad != n:
            a = jnp.pad(a, ((0, 0), (0, n_pad - n)))
        return a.reshape(batch, rows_pad, _LANE)

    x3, t3, m3 = prep(x), prep(t), prep(m)

    grid = (rows_pad // rows_tile,)
    in_spec = pl.BlockSpec((batch, rows_tile, _LANE), lambda k: (0, k, 0))
    out_spec = pl.BlockSpec((batch, 1), lambda k: (0, 0))

    per_sample = pl.pallas_call(
        _make_dice_kernel(loss_weight),
        out_shape=jax.ShapeDtypeStruct((batch, 1), jnp.float32),
        grid_spec=pltpu.PrefetchScalarGridSpec(
            num_scalar_prefetch=0,
            grid=grid,
            in_specs=[in_spec, in_spec, in_spec],
            out_specs=out_spec,
            scratch_shapes=[
                pltpu.VMEM((batch, _LANE), jnp.float32),
                pltpu.VMEM((batch, _LANE), jnp.float32),
                pltpu.VMEM((batch, _LANE), jnp.float32),
            ],
        ),
        compiler_params=pltpu.CompilerParams(
            dimension_semantics=("arbitrary",),
            vmem_limit_bytes=48 * 1024 * 1024,
        ),
    )(x3, t3, m3)

    per_sample = per_sample.reshape(batch)
    if reduce:
        return jnp.mean(per_sample)
    return per_sample


def _reference_dice_loss(inp, target, mask, loss_weight=1.0, reduce=True):
    b = inp.shape[0]
    x = jax.nn.sigmoid(inp.reshape(b, -1).astype(jnp.float32))
    t = target.reshape(b, -1).astype(jnp.float32)
    m = mask.reshape(b, -1).astype(jnp.float32)
    x = x * m
    t = t * m
    a = jnp.sum(x * t, axis=1)
    bb = jnp.sum(x * x, axis=1) + 0.001
    cc = jnp.sum(t * t, axis=1) + 0.001
    loss = loss_weight * (1.0 - 2.0 * a / (bb + cc))
    return jnp.mean(loss) if reduce else loss


if __name__ == "__main__":
    key = jax.random.PRNGKey(0)
    k1, k2, k3 = jax.random.split(key, 3)

    # Test 1: f32 inputs, aligned N, single grid step.
    B, C, H, W = 2, 4, 16, 16
    inp = jax.random.normal(k1, (B, C, H, W), dtype=jnp.float32)
    target = (jax.random.uniform(k2, (B, C, H, W)) > 0.5).astype(jnp.float32)
    mask = (jax.random.uniform(k3, (B, C, H, W)) > 0.2).astype(jnp.float32)

    loss = jax.block_until_ready(dice_loss(inp, target, mask, 1.0, True))
    ref = jax.block_until_ready(_reference_dice_loss(inp, target, mask, 1.0, True))
    assert jnp.allclose(loss, ref, atol=1e-5, rtol=1e-5), (loss, ref)

    # Test 2: native bf16 inputs (narrow HBM traffic), reduce=False.
    inp_bf = inp.astype(jnp.bfloat16)
    tgt_bf = target.astype(jnp.bfloat16)
    msk_bf = mask.astype(jnp.bfloat16)
    loss_bf = jax.block_until_ready(dice_loss(inp_bf, tgt_bf, msk_bf, 2.0, False))
    ref_bf = jax.block_until_ready(_reference_dice_loss(inp_bf, tgt_bf, msk_bf, 2.0, False))
    assert jnp.allclose(loss_bf, ref_bf, atol=1e-4, rtol=1e-4), (loss_bf, ref_bf)

    # Test 3: non-128-aligned N exercises the zero-padding path.
    k4, k5, k6 = jax.random.split(jax.random.PRNGKey(1), 3)
    inp2 = jax.random.normal(k4, (B, C, 17, 17), dtype=jnp.float32)
    tgt2 = (jax.random.uniform(k5, (B, C, 17, 17)) > 0.5).astype(jnp.float32)
    msk2 = (jax.random.uniform(k6, (B, C, 17, 17)) > 0.2).astype(jnp.float32)
    loss2 = jax.block_until_ready(dice_loss(inp2, tgt2, msk2, 1.0, True))
    ref2 = jax.block_until_ready(_reference_dice_loss(inp2, tgt2, msk2, 1.0, True))
    assert jnp.allclose(loss2, ref2, atol=1e-5, rtol=1e-5), (loss2, ref2)

    # Test 4: force a small row tile to exercise multi-step grid accumulation.
    k7, k8, k9 = jax.random.split(jax.random.PRNGKey(2), 3)
    inp3 = jax.random.normal(k7, (B, C, 32, 32), dtype=jnp.float32)
    tgt3 = (jax.random.uniform(k8, (B, C, 32, 32)) > 0.5).astype(jnp.float32)
    msk3 = (jax.random.uniform(k9, (B, C, 32, 32)) > 0.2).astype(jnp.float32)
    loss3 = jax.block_until_ready(dice_loss(inp3, tgt3, msk3, 1.0, True, rows_tile=8))
    ref3 = jax.block_until_ready(_reference_dice_loss(inp3, tgt3, msk3, 1.0, True))
    assert jnp.allclose(loss3, ref3, atol=1e-5, rtol=1e-5), (loss3, ref3)

    print("KERNEL_OK")
</pallas_src>

<mosaic_0001>
module attributes {stable_mosaic.version = 11 : i64} {
  func.func @dice_kernel(%arg0: i32, %arg1: memref<2x8x128xf32, #tpu.memory_space<vmem>>, %arg2: memref<2x8x128xf32, #tpu.memory_space<vmem>>, %arg3: memref<2x8x128xf32, #tpu.memory_space<vmem>>, %arg4: memref<2x1xf32, #tpu.memory_space<vmem>>, %arg5: memref<2x128xf32, #tpu.memory_space<vmem>>, %arg6: memref<2x128xf32, #tpu.memory_space<vmem>>, %arg7: memref<2x128xf32, #tpu.memory_space<vmem>>) attributes {dimension_semantics = [#tpu.dimension_semantics<arbitrary>], iteration_bounds = array<i64: 1>, scalar_prefetch = 0 : i64, scratch_operands = 3 : i64, tpu.core_type = #tpu.core_type<tc>, window_params = [{transform_indices = @transform_0, window_bounds = array<i64: 2, 8, 128>}, {transform_indices = @transform_1, window_bounds = array<i64: 2, 8, 128>}, {transform_indices = @transform_2, window_bounds = array<i64: 2, 8, 128>}, {pipeline_mode = #tpu.pipeline_mode<synchronous>, transform_indices = @transform_3, window_bounds = array<i64: 2, 1>}]} {
    %c0_i32 = arith.constant 0 : i32
    %0 = arith.cmpi eq, %arg0, %c0_i32 : i32
    %1 = arith.extui %0 : i1 to i32
    %c0_i32_0 = arith.constant 0 : i32
    %2 = arith.cmpi ne, %1, %c0_i32_0 : i32
    scf.if %2 {
      %cst_26 = arith.constant 0.000000e+00 : f32
      %31 = vector.broadcast %cst_26 : f32 to vector<2x128xf32>
      %c0_27 = arith.constant 0 : index
      %c0_28 = arith.constant 0 : index
      %32 = vector.load %arg5[%c0_27, %c0_28] : memref<2x128xf32, #tpu.memory_space<vmem>>, vector<2x128xf32>
      tpu.vector_store %arg5[%c0_27, %c0_28], %31 {strides = array<i32>} : memref<2x128xf32, #tpu.memory_space<vmem>>, vector<2x128xf32>,
      %cst_29 = arith.constant 0.000000e+00 : f32
      %33 = vector.broadcast %cst_29 : f32 to vector<2x128xf32>
      %c0_30 = arith.constant 0 : index
      %c0_31 = arith.constant 0 : index
      %34 = vector.load %arg6[%c0_30, %c0_31] : memref<2x128xf32, #tpu.memory_space<vmem>>, vector<2x128xf32>
      tpu.vector_store %arg6[%c0_30, %c0_31], %33 {strides = array<i32>} : memref<2x128xf32, #tpu.memory_space<vmem>>, vector<2x128xf32>,
      %cst_32 = arith.constant 0.000000e+00 : f32
      %35 = vector.broadcast %cst_32 : f32 to vector<2x128xf32>
      %c0_33 = arith.constant 0 : index
      %c0_34 = arith.constant 0 : index
      %36 = vector.load %arg7[%c0_33, %c0_34] : memref<2x128xf32, #tpu.memory_space<vmem>>, vector<2x128xf32>
      tpu.vector_store %arg7[%c0_33, %c0_34], %35 {strides = array<i32>} : memref<2x128xf32, #tpu.memory_space<vmem>>, vector<2x128xf32>,
    } else {
    }
    %c0 = arith.constant 0 : index
    %c0_1 = arith.constant 0 : index
    %c0_2 = arith.constant 0 : index
    %3 = vector.load %arg1[%c0, %c0_1, %c0_2] : memref<2x8x128xf32, #tpu.memory_space<vmem>>, vector<2x8x128xf32>
    %4 = arith.negf %3 : vector<2x8x128xf32>
    %5 = math.exp %4 : vector<2x8x128xf32>
    %cst = arith.constant 1.000000e+00 : f32
    %6 = vector.broadcast %cst : f32 to vector<2x8x128xf32>
    %7 = arith.addf %6, %5 : vector<2x8x128xf32>
    %8 = arith.divf %6, %7 : vector<2x8x128xf32>
    %c0_3 = arith.constant 0 : index
    %c0_4 = arith.constant 0 : index
    %c0_5 = arith.constant 0 : index
    %9 = vector.load %arg2[%c0_3, %c0_4, %c0_5] : memref<2x8x128xf32, #tpu.memory_space<vmem>>, vector<2x8x128xf32>
    %c0_6 = arith.constant 0 : index
    %c0_7 = arith.constant 0 : index
    %c0_8 = arith.constant 0 : index
    %10 = vector.load %arg3[%c0_6, %c0_7, %c0_8] : memref<2x8x128xf32, #tpu.memory_space<vmem>>, vector<2x8x128xf32>
    %11 = arith.mulf %8, %10 : vector<2x8x128xf32>
    %12 = arith.mulf %9, %10 : vector<2x8x128xf32>
    %c0_9 = arith.constant 0 : index
    %c0_10 = arith.constant 0 : index
    %13 = vector.load %arg5[%c0_9, %c0_10] : memref<2x128xf32, #tpu.memory_space<vmem>>, vector<2x128xf32>
    %14 = arith.mulf %11, %12 : vector<2x8x128xf32>
    %cst_11 = arith.constant dense<0.000000e+00> : vector<2x128xf32>
    %15 = vector.multi_reduction <add>, %14, %cst_11 [1] : vector<2x8x128xf32> to vector<2x128xf32>
    %16 = arith.addf %13, %15 : vector<2x128xf32>
    %c0_12 = arith.constant 0 : index
    %c0_13 = arith.constant 0 : index
    %17 = vector.load %arg5[%c0_12, %c0_13] : memref<2x128xf32, #tpu.memory_space<vmem>>, vector<2x128xf32>
    tpu.vector_store %arg5[%c0_12, %c0_13], %16 {strides = array<i32>} : memref<2x128xf32, #tpu.memory_space<vmem>>, vector<2x128xf32>,
    %c0_14 = arith.constant 0 : index
    %c0_15 = arith.constant 0 : index
    %18 = vector.load %arg6[%c0_14, %c0_15] : memref<2x128xf32, #tpu.memory_space<vmem>>, vector<2x128xf32>
    %19 = arith.mulf %11, %11 : vector<2x8x128xf32>
    %cst_16 = arith.constant dense<0.000000e+00> : vector<2x128xf32>
    %20 = vector.multi_reduction <add>, %19, %cst_16 [1] : vector<2x8x128xf32> to vector<2x128xf32>
    %21 = arith.addf %18, %20 : vector<2x128xf32>
    %c0_17 = arith.constant 0 : index
    %c0_18 = arith.constant 0 : index
    %22 = vector.load %arg6[%c0_17, %c0_18] : memref<2x128xf32, #tpu.memory_space<vmem>>, vector<2x128xf32>
    tpu.vector_store %arg6[%c0_17, %c0_18], %21 {strides = array<i32>} : memref<2x128xf32, #tpu.memory_space<vmem>>, vector<2x128xf32>,
    %c0_19 = arith.constant 0 : index
    %c0_20 = arith.constant 0 : index
    %23 = vector.load %arg7[%c0_19, %c0_20] : memref<2x128xf32, #tpu.memory_space<vmem>>, vector<2x128xf32>
    %24 = arith.mulf %12, %12 : vector<2x8x128xf32>
    %cst_21 = arith.constant dense<0.000000e+00> : vector<2x128xf32>
    %25 = vector.multi_reduction <add>, %24, %cst_21 [1] : vector<2x8x128xf32> to vector<2x128xf32>
    %26 = arith.addf %23, %25 : vector<2x128xf32>
    %c0_22 = arith.constant 0 : index
    %c0_23 = arith.constant 0 : index
    %27 = vector.load %arg7[%c0_22, %c0_23] : memref<2x128xf32, #tpu.memory_space<vmem>>, vector<2x128xf32>
    tpu.vector_store %arg7[%c0_22, %c0_23], %26 {strides = array<i32>} : memref<2x128xf32, #tpu.memory_space<vmem>>, vector<2x128xf32>,
    %c0_i32_24 = arith.constant 0 : i32
    %28 = arith.cmpi eq, %arg0, %c0_i32_24 : i32
    %29 = arith.extui %28 : i1 to i32
    %c0_i32_25 = arith.constant 0 : i32
    %30 = arith.cmpi ne, %29, %c0_i32_25 : i32
    scf.if %30 {
      %c0_26 = arith.constant 0 : index
      %c0_27 = arith.constant 0 : index
      %31 = vector.load %arg5[%c0_26, %c0_27] : memref<2x128xf32, #tpu.memory_space<vmem>>, vector<2x128xf32>
      %cst_28 = arith.constant dense<0.000000e+00> : vector<2xf32>
      %32 = vector.multi_reduction <add>, %31, %cst_28 [1] : vector<2x128xf32> to vector<2xf32>
      %33 = vector.shape_cast %32 : vector<2xf32> to vector<2x1xf32>
      %c0_29 = arith.constant 0 : index
      %c0_30 = arith.constant 0 : index
      %34 = vector.load %arg6[%c0_29, %c0_30] : memref<2x128xf32, #tpu.memory_space<vmem>>, vector<2x128xf32>
      %cst_31 = arith.constant dense<0.000000e+00> : vector<2xf32>
      %35 = vector.multi_reduction <add>, %34, %cst_31 [1] : vector<2x128xf32> to vector<2xf32>
      %36 = vector.shape_cast %35 : vector<2xf32> to vector<2x1xf32>
      %cst_32 = arith.constant 1.000000e-03 : f32
      %37 = vector.broadcast %cst_32 : f32 to vector<2x1xf32>
      %38 = arith.addf %36, %37 : vector<2x1xf32>
      %c0_33 = arith.constant 0 : index
      %c0_34 = arith.constant 0 : index
      %39 = vector.load %arg7[%c0_33, %c0_34] : memref<2x128xf32, #tpu.memory_space<vmem>>, vector<2x128xf32>
      %cst_35 = arith.constant dense<0.000000e+00> : vector<2xf32>
      %40 = vector.multi_reduction <add>, %39, %cst_35 [1] : vector<2x128xf32> to vector<2xf32>
      %41 = vector.shape_cast %40 : vector<2xf32> to vector<2x1xf32>
      %cst_36 = arith.constant 1.000000e-03 : f32
      %42 = vector.broadcast %cst_36 : f32 to vector<2x1xf32>
      %43 = arith.addf %41, %42 : vector<2x1xf32>
      %cst_37 = arith.constant 2.000000e+00 : f32
      %44 = vector.broadcast %cst_37 : f32 to vector<2x1xf32>
      %45 = arith.mulf %44, %33 : vector<2x1xf32>
      %46 = arith.addf %38, %43 : vector<2x1xf32>
      %47 = arith.divf %45, %46 : vector<2x1xf32>
      %cst_38 = arith.constant 1.000000e+00 : f32
      %48 = vector.broadcast %cst_38 : f32 to vector<2x1xf32>
      %49 = arith.subf %48, %47 : vector<2x1xf32>
      %cst_39 = arith.constant 1.000000e+00 : f32
      %50 = vector.broadcast %cst_39 : f32 to vector<2x1xf32>
      %51 = arith.mulf %50, %49 : vector<2x1xf32>
      %c0_40 = arith.constant 0 : index
      %c0_41 = arith.constant 0 : index
      %52 = vector.load %arg4[%c0_40, %c0_41] : memref<2x1xf32, #tpu.memory_space<vmem>>, vector<2x1xf32>
      tpu.vector_store %arg4[%c0_40, %c0_41], %51 {strides = array<i32>} : memref<2x1xf32, #tpu.memory_space<vmem>>, vector<2x1xf32>,
    } else {
    }
    return
  }
  func.func @transform_0(%arg0: i32) -> (i32, i32, i32) {
    %c0_i32 = arith.constant 0 : i32
    %c0_i32_0 = arith.constant 0 : i32
    %c0_i32_1 = arith.constant 0 : i32
    return %c0_i32, %arg0, %c0_i32_0 : i32, i32, i32
  }
  func.func @transform_1(%arg0: i32) -> (i32, i32, i32) {
    %c0_i32 = arith.constant 0 : i32
    %c0_i32_0 = arith.constant 0 : i32
    %c0_i32_1 = arith.constant 0 : i32
    return %c0_i32, %arg0, %c0_i32_0 : i32, i32, i32
  }
  func.func @transform_2(%arg0: i32) -> (i32, i32, i32) {
    %c0_i32 = arith.constant 0 : i32
    %c0_i32_0 = arith.constant 0 : i32
    %c0_i32_1 = arith.constant 0 : i32
    return %c0_i32, %arg0, %c0_i32_0 : i32, i32, i32
  }
  func.func @transform_3(%arg0: i32) -> (i32, i32) {
    %c0_i32 = arith.constant 0 : i32
    %c0_i32_0 = arith.constant 0 : i32
    %c0_i32_1 = arith.constant 0 : i32
    return %c0_i32, %c0_i32_0 : i32, i32
  }
}

</mosaic_0001>

<llo_original>
// kernel: tpu_custom_call.1
$region0: #{tpu_custom_call.1}
  #allocation0 [shape = 'u32[]', space=smem, size = 0x4, offset = 0x4, fixed_abs, tag = 'smem constant byte address 0x4 - core index']
  #allocation1 [shape = 'u32[144,128]{1,0:T(1,128)}', space=vmem, size = 0x12000, scoped, tag = 'internal scratch']
  #allocation2 [shape = 'f32[2,128]{1,0:T(2,128)}', space=vmem, size = 0x400, scoped, tag = 'scratch operand']
  #allocation3 [shape = 'f32[2,128]{1,0:T(2,128)}', space=vmem, size = 0x400, scoped, tag = 'scratch operand']
  #allocation4 [shape = 'f32[2,128]{1,0:T(2,128)}', space=vmem, size = 0x400, scoped, tag = 'scratch operand']
  %s0 = inlined_call_operand.hbm [shape: f32[2,8,128], index: 0, kind: input, shape index: {}]
  %s1 = inlined_call_operand.hbm [shape: f32[2,8,128], index: 1, kind: input, shape index: {}]
  %s2 = inlined_call_operand.hbm [shape: f32[2,8,128], index: 2, kind: input, shape index: {}]
  %s3 = inlined_call_operand.vmem [shape: f32[2,1], index: 3, kind: output, shape index: {}]
  %s4 = sld [smem:[#allocation0]]
  $region42: #{tpu_custom_call.1} parent=0
    _
  %s6 = ssub.s32 1, %s4
  %s7 = scalar_select 0, %s6, %s4
  $region1: #{tpu_custom_call.1} parent=0
    #allocation5 [shape = 'u8[8192]{0}', space=vmem, size = 0x2000, scoped, tag = 'input window, operand 0, single buffered']
    #allocation6 [shape = 's32[1]{0}', space=sflag, size = 0x4, scoped, tag = 'scoped memory for tpu_custom_call.1']
    #allocation7 [shape = 'u8[8192]{0}', space=vmem, size = 0x2000, scoped, tag = 'input window, operand 1, single buffered']
    #allocation8 [shape = 's32[1]{0}', space=sflag, size = 0x4, scoped, tag = 'scoped memory for tpu_custom_call.1']
    #allocation9 [shape = 'u8[8192]{0}', space=vmem, size = 0x2000, scoped, tag = 'input window, operand 2, single buffered']
    %8 = vsyncpa [#allocation6], 0
    %9 = vsyncpa [#allocation8], 0
    // Predicated region
    $region2: #{tpu_custom_call.1} parent=1 // pred_check
      _
    $region3: #{tpu_custom_call.1} parent=1 // pred_check_branch
      %11 = sbr.rel (0) target = $region5
    $region4: #{tpu_custom_call.1} parent=1 // pred_region
      %s13 = ssub.s32 256, 256
      %14 = vsyncadd [#allocation6], %s13
      %s15 = sshll.u32 [#allocation5], 4
      %s16 = int_to_ptr.vmem [resolvable:$true] %s15
      %21 = dma.hbm_to_vmem [thread:$0]  %s0, 256, %s16, [#allocation6], 128, 128, 8
    $region5: #{tpu_custom_call.1} parent=1 // pred_fallthru
      _
    // Predicated region
    $region6: #{tpu_custom_call.1} parent=1 // pred_check
      _
    $region7: #{tpu_custom_call.1} parent=1 // pred_check_branch
      %23 = sbr.rel (0) target = $region9
    $region8: #{tpu_custom_call.1} parent=1 // pred_region
      %s25 = ssub.s32 256, 256
      %26 = vsyncadd [#allocation8], %s25
      %s27 = sshll.u32 [#allocation7], 4
      %s28 = int_to_ptr.vmem [resolvable:$true] %s27
      %33 = dma.hbm_to_vmem [thread:$0]  %s1, 256, %s28, [#allocation8], 128, 128, 8
    $region9: #{tpu_custom_call.1} parent=1 // pred_fallthru
      _
    // Predicated region
    $region10: #{tpu_custom_call.1} parent=1 // pred_check
      _
    $region11: #{tpu_custom_call.1} parent=1 // pred_check_branch
      %35 = sbr.rel (0) target = $region13
    $region12: #{tpu_custom_call.1} parent=1 // pred_region
      %s37 = ssub.s32 256, 256
      %38 = vsyncadd [#allocation8], %s37
      %s39 = sshll.u32 [#allocation9], 4
      %s40 = int_to_ptr.vmem [resolvable:$true] %s39
      %45 = dma.hbm_to_vmem [thread:$0]  %s2, 256, %s40, [#allocation8], 128, 128, 8
    $region13: #{tpu_custom_call.1} parent=1 // pred_fallthru
      _
    // Predicated region
    $region14: #{tpu_custom_call.1} parent=1 // pred_check
      _
    $region15: #{tpu_custom_call.1} parent=1 // pred_check_branch
      %47 = sbr.rel (0) target = $region17
    $region16: #{tpu_custom_call.1} parent=1 // pred_region
      %48 = dma.done [#allocation6], 256
    $region17: #{tpu_custom_call.1} parent=1 // pred_fallthru
      _
    // Predicated region
    $region18: #{tpu_custom_call.1} parent=1 // pred_check
      _
    $region19: #{tpu_custom_call.1} parent=1 // pred_check_branch
      %50 = sbr.rel (0) target = $region21
    $region20: #{tpu_custom_call.1} parent=1 // pred_region
      %51 = dma.done [#allocation8], 256
    $region21: #{tpu_custom_call.1} parent=1 // pred_fallthru
      _
    // Predicated region
    $region22: #{tpu_custom_call.1} parent=1 // pred_check
      _
    $region23: #{tpu_custom_call.1} parent=1 // pred_check_branch
      %53 = sbr.rel (0) target = $region25
    $region24: #{tpu_custom_call.1} parent=1 // pred_region
      %54 = dma.done [#allocation8], 256
    $region25: #{tpu_custom_call.1} parent=1 // pred_fallthru
      _
    %p55 = scmp.eq.s32.totalorder 0, 0
    // Predicated region
    $region26: #{tpu_custom_call.1} parent=1 // pred_check
      %p56 = pneg %p55
    $region27: #{tpu_custom_call.1} parent=1 // pred_check_branch
      %58 = sbr.rel (%p56) target = $region29
    $region28: #{tpu_custom_call.1} parent=1 // pred_region
      %59 = vst [vmem:[#allocation2] sm:$0x3] 0.0
      %60 = vst [vmem:[#allocation3] sm:$0x3] 0.0
      %61 = vst [vmem:[#allocation4] sm:$0x3] 0.0
    $region29: #{tpu_custom_call.1} parent=1 // pred_fallthru
      _
    %v62 = vld [vmem:[#allocation5] sm:$0xff]
    %v63 = vld [vmem:[#allocation5 + $0x8] sm:$0xff]
    %v64 = vxor.u32 %v62, 2147483648
    %v65 = vxor.u32 %v63, 2147483648
    %v66 = vmul.f32 %v64, 1.442695
    %v67 = vpow.pop %v66
    %v68 = vmul.f32 %v65, 1.442695
    %v69 = vpow.pop %v68
    %v70 = vadd.f32 %v67, 1.0
    %v71 = vadd.f32 %v69, 1.0
    %v72 = vrcp.pop %v70
    %v73 = vmul.f32 1.0, %v72
    %v74 = vrcp.pop %v71
    %v75 = vmul.f32 1.0, %v74
    %v76 = vld [vmem:[#allocation7] sm:$0xff]
    %v77 = vld [vmem:[#allocation7 + $0x8] sm:$0xff]
    %v78 = vld [vmem:[#allocation9] sm:$0xff]
    %v79 = vld [vmem:[#allocation9 + $0x8] sm:$0xff]
    %v80 = vmul.f32 %v73, %v78
    %v81 = vmul.f32 %v75, %v79
    %v82 = vmul.f32 %v76, %v78
    %v83 = vmul.f32 %v77, %v79
    %v84 = vld [vmem:[#allocation2] sm:$0x3]
    %v85 = vmul.f32 %v80, %v82
    %v86 = vmul.f32 %v81, %v83
    %v87 = vrot.slane %v85, 4
    %v88 = vadd.f32 %v85, %v87
    %v89 = vrot.slane %v88, 2
    %v90 = vadd.f32 %v88, %v89
    %v91 = vrot.slane %v90, 1
    %v92 = vadd.f32 %v90, %v91
    %v93 = vrot.slane %v86, 4
    %v94 = vadd.f32 %v86, %v93
    %v95 = vrot.slane %v94, 2
    %v96 = vadd.f32 %v94, %v95
    %v97 = vrot.slane %v96, 1
    %v98 = vadd.f32 %v96, %v97
    %vm101 = vcmask 1041409
    %v102 = vsel %vm101, %v98, %v92
    %v104 = vadd.f32 %v84, %v102
    %105 = vst [vmem:[#allocation2] sm:$0x3] %v104
    %v106 = vld [vmem:[#allocation3] sm:$0x3]
    %v107 = vmul.f32 %v80, %v80
    %v108 = vmul.f32 %v81, %v81
    %v109 = vrot.slane %v107, 4
    %v110 = vadd.f32 %v107, %v109
    %v111 = vrot.slane %v110, 2
    %v112 = vadd.f32 %v110, %v111
    %v113 = vrot.slane %v112, 1
    %v114 = vadd.f32 %v112, %v113
    %v115 = vrot.slane %v108, 4
    %v116 = vadd.f32 %v108, %v115
    %v117 = vrot.slane %v116, 2
    %v118 = vadd.f32 %v116, %v117
    %v119 = vrot.slane %v118, 1
    %v120 = vadd.f32 %v118, %v119
    %v123 = vsel %vm101, %v120, %v114
    %v125 = vadd.f32 %v106, %v123
    %126 = vst [vmem:[#allocation3] sm:$0x3] %v125
    %v127 = vld [vmem:[#allocation4] sm:$0x3]
    %v128 = vmul.f32 %v82, %v82
    %v129 = vmul.f32 %v83, %v83
    %v130 = vrot.slane %v128, 4
    %v131 = vadd.f32 %v128, %v130
    %v132 = vrot.slane %v131, 2
    %v133 = vadd.f32 %v131, %v132
    %v134 = vrot.slane %v133, 1
    %v135 = vadd.f32 %v133, %v134
    %v136 = vrot.slane %v129, 4
    %v137 = vadd.f32 %v129, %v136
    %v138 = vrot.slane %v137, 2
    %v139 = vadd.f32 %v137, %v138
    %v140 = vrot.slane %v139, 1
    %v141 = vadd.f32 %v139, %v140
    %v144 = vsel %vm101, %v141, %v135
    %v146 = vadd.f32 %v127, %v144
    %147 = vst [vmem:[#allocation4] sm:$0x3] %v146
    // Predicated region
    $region30: #{tpu_custom_call.1} parent=1 // pred_check
      %p148 = pneg %p55
    $region31: #{tpu_custom_call.1} parent=1 // pred_check_branch
      %150 = sbr.rel (%p148) target = $region33
    $region32: #{tpu_custom_call.1} parent=1 // pred_region
      %v151 = vld [vmem:[#allocation2] sm:$0x3]
      %vm152 = vcmask 1041408
      %v153 = vsel %vm152, %v151, 0.0
      %154 = vadd.xlane.f32.xlu0 %v153
      %v155 = vpop.xlane.xlu0 %154
      %v156 = vld [vmem:[#allocation3] sm:$0x3]
      %v157 = vsel %vm152, %v156, 0.0
      %158 = vadd.xlane.f32.xlu0 %v157
      %v159 = vpop.xlane.xlu0 %158
      %v160 = vadd.f32 %v159, 0.001
      %v161 = vld [vmem:[#allocation4] sm:$0x3]
      %v162 = vsel %vm152, %v161, 0.0
      %163 = vadd.xlane.f32.xlu0 %v162
      %v164 = vpop.xlane.xlu0 %163
      %v165 = vadd.f32 %v164, 0.001
      %v166 = vmul.f32 %v155, 2.0
      %v167 = vadd.f32 %v160, %v165
      %v168 = vrcp.pop %v167
      %v169 = vmul.f32 %v166, %v168
      %v170 = vsub.f32 1.0, %v169
      %vm171 = vcmask 1024
      %172 = vst.msk [vmem:[%s3] sm:$0x3] %vm171, %v170
    $region33: #{tpu_custom_call.1} parent=1 // pred_fallthru
      _
    // Predicated region
    $region34: #{tpu_custom_call.1} parent=1 // pred_check
      _
    $region35: #{tpu_custom_call.1} parent=1 // pred_check_branch
      %174 = sbr.rel (0) target = $region37
    $region36: #{tpu_custom_call.1} parent=1 // pred_region
      _
    $region37: #{tpu_custom_call.1} parent=1 // pred_fallthru
      _
    // Predicated region
    $region38: #{tpu_custom_call.1} parent=1 // pred_check
      _
    $region39: #{tpu_custom_call.1} parent=1 // pred_check_branch
      %176 = sbr.rel (0) target = $region41
    $region40: #{tpu_custom_call.1} parent=1 // pred_region
      _
    $region41: #{tpu_custom_call.1} parent=1 // pred_fallthru
      _
    %177 = vsyncpa [#allocation6], 1
    %178 = vsyncpa [#allocation8], 1

</llo_original>
